<compile_context>
chip_gen: v7x
topology: tpu7x:2x2x1
jax: 0.10.0
libtpu: 0.0.40
codegen_flags: <defaults>
</compile_context>

<pallas_src>
import jax
import jax.numpy as jnp
from jax.experimental import pallas as pl
from jax.experimental.pallas import tpu as pltpu


def _jxy_kernel(x_ref, relu_ref, sig_ref):
    x = x_ref[...]
    # ReLU on the VPU.
    relu_ref[...] = jnp.maximum(x, 0.0)
    # Sigmoid via a single EUP tanh: sigmoid(x) = 0.5 * tanh(0.5 * x) + 0.5.
    sig_ref[...] = 0.5 * jnp.tanh(0.5 * x) + 0.5


_LANE_CANDIDATES = (4096, 2048, 1024, 512, 256, 128)

# Inputs at or below this size run as a single block: at this scale the
# ~0.35 us per-grid-step overhead outweighs any DMA/compute overlap.
_SINGLE_BLOCK_BYTES = 256 << 10
# Hard per-block cap so 3 streams x 2 buffers stays ~24 MiB worst case
# (safe for v7x's 64 MiB per-TC VMEM and v5e's smaller budget).
_MAX_BLOCK_BYTES = 4 << 20
# Explicit scoped-VMEM request (instead of relying on per-chip defaults).
_VMEM_LIMIT_BYTES = 32 << 20


def _pick_lanes(size):
    """Largest lane count (multiple of 128) dividing `size`, preferring >=8 rows."""
    for cand in _LANE_CANDIDATES:
        if size % cand == 0 and size // cand >= 8:
            return cand
    for cand in _LANE_CANDIDATES:
        if size % cand == 0:
            return cand
    return None


def _run_pallas_flat(flat, size, dtype, target_block_bytes):
    """Run the kernel on a flat array whose size is a multiple of 128."""
    lanes = _pick_lanes(size)
    rows = size // lanes
    x2d = flat.reshape(rows, lanes)

    elem_bytes = jnp.dtype(dtype).itemsize
    row_bytes = lanes * elem_bytes
    total_bytes = rows * row_bytes

    cap_bytes = min(int(target_block_bytes), _MAX_BLOCK_BYTES)
    cap_rows = max(1, cap_bytes // row_bytes)

    if total_bytes <= _SINGLE_BLOCK_BYTES:
        # Tiny input: one full-extent block (always a legal block shape).
        block_rows = rows
    else:
        # Ensure >= ~8 grid steps for pipelining and v7x megacore sharding,
        # while respecting the per-block byte cap.
        rows_per_step = pl.cdiv(rows, 8)
        block_rows = min(cap_rows, rows_per_step)
        if block_rows >= 32:
            block_rows = (block_rows // 32) * 32  # sublane packing (f32/bf16/int8)
        else:
            block_rows = max(8, (block_rows // 8) * 8)  # (8,128) BlockSpec rule
        block_rows = min(block_rows, rows)

    grid = (pl.cdiv(rows, block_rows),)
    spec = pl.BlockSpec((block_rows, lanes), lambda i: (i, 0))

    out_shape = (
        jax.ShapeDtypeStruct((rows, lanes), dtype),
        jax.ShapeDtypeStruct((rows, lanes), dtype),
    )

    relu_out, sig_out = pl.pallas_call(
        _jxy_kernel,
        out_shape=out_shape,
        grid_spec=pltpu.PrefetchScalarGridSpec(
            num_scalar_prefetch=0,
            grid=grid,
            in_specs=[spec],
            out_specs=(spec, spec),
        ),
        compiler_params=pltpu.CompilerParams(
            dimension_semantics=("parallel",),
            vmem_limit_bytes=_VMEM_LIMIT_BYTES,
        ),
    )(x2d)

    return relu_out.reshape(-1), sig_out.reshape(-1)


def jxy_forward(x, *, target_block_bytes=2 << 20):
    """Returns (relu(x), sigmoid(x)) with the same shape/dtype as x."""
    orig_shape = x.shape
    dtype = x.dtype
    size = int(x.size)

    if size == 0:
        empty = jnp.zeros(orig_shape, dtype)
        return empty, empty

    flat = x.reshape(-1)
    aligned = (size // 128) * 128

    if aligned == size:
        relu_flat, sig_flat = _run_pallas_flat(flat, size, dtype, target_block_bytes)
    elif aligned == 0:
        # Whole array is < 128 elements: a kernel launch is pure overhead.
        relu_flat = jnp.maximum(flat, 0).astype(dtype)
        sig_flat = jax.nn.sigmoid(flat).astype(dtype)
    else:
        # 128-aligned prefix through the kernel (zero extra HBM passes);
        # only the <=127-element tail is handled with plain jnp.
        head_r, head_s = _run_pallas_flat(
            flat[:aligned], aligned, dtype, target_block_bytes
        )
        tail = flat[aligned:]
        tail_r = jnp.maximum(tail, 0).astype(dtype)
        tail_s = jax.nn.sigmoid(tail).astype(dtype)
        relu_flat = jnp.concatenate([head_r, tail_r])
        sig_flat = jnp.concatenate([head_s, tail_s])

    return relu_flat.reshape(orig_shape), sig_flat.reshape(orig_shape)


if __name__ == "__main__":
    key = jax.random.PRNGKey(0)
    # Small NCHW input consistent with typical module usage.
    x = jax.random.normal(key, (2, 4, 16, 16), dtype=jnp.float32)

    fwd = jax.jit(jxy_forward)
    relu_out, sig_out = fwd(x)
    jax.block_until_ready((relu_out, sig_out))

    # Sanity check against plain-JAX reference.
    ref_relu = jnp.maximum(x, 0.0)
    ref_sig = jax.nn.sigmoid(x)
    assert relu_out.shape == x.shape and sig_out.shape == x.shape
    assert relu_out.dtype == x.dtype and sig_out.dtype == x.dtype
    assert jnp.allclose(relu_out, ref_relu, atol=1e-6)
    assert jnp.allclose(sig_out, ref_sig, atol=1e-6)

    print("KERNEL_OK")
</pallas_src>

<mosaic_0001>
module attributes {stable_mosaic.version = 11 : i64} {
  func.func @_jxy_kernel(%arg0: i32, %arg1: memref<8x256xf32, #tpu.memory_space<vmem>>, %arg2: memref<8x256xf32, #tpu.memory_space<vmem>>, %arg3: memref<8x256xf32, #tpu.memory_space<vmem>>) attributes {dimension_semantics = [#tpu.dimension_semantics<parallel>], iteration_bounds = array<i64: 1>, scalar_prefetch = 0 : i64, scratch_operands = 0 : i64, tpu.core_type = #tpu.core_type<tc>, window_params = [{transform_indices = @transform_0, window_bounds = array<i64: 8, 256>}, {transform_indices = @transform_1, window_bounds = array<i64: 8, 256>}, {transform_indices = @transform_2, window_bounds = array<i64: 8, 256>}]} {
    %c0 = arith.constant 0 : index
    %c0_0 = arith.constant 0 : index
    %0 = vector.load %arg1[%c0, %c0_0] : memref<8x256xf32, #tpu.memory_space<vmem>>, vector<8x256xf32>
    %cst = arith.constant 0.000000e+00 : f32
    %1 = vector.broadcast %cst : f32 to vector<8x256xf32>
    %2 = arith.maximumf %0, %1 : vector<8x256xf32>
    %c0_1 = arith.constant 0 : index
    %c0_2 = arith.constant 0 : index
    %3 = vector.load %arg2[%c0_1, %c0_2] : memref<8x256xf32, #tpu.memory_space<vmem>>, vector<8x256xf32>
    tpu.vector_store %arg2[%c0_1, %c0_2], %2 {strides = array<i32>} : memref<8x256xf32, #tpu.memory_space<vmem>>, vector<8x256xf32>,
    %cst_3 = arith.constant 5.000000e-01 : f32
    %4 = vector.broadcast %cst_3 : f32 to vector<8x256xf32>
    %5 = arith.mulf %4, %0 : vector<8x256xf32>
    %6 = math.tanh %5 : vector<8x256xf32>
    %cst_4 = arith.constant 5.000000e-01 : f32
    %7 = vector.broadcast %cst_4 : f32 to vector<8x256xf32>
    %8 = arith.mulf %7, %6 : vector<8x256xf32>
    %cst_5 = arith.constant 5.000000e-01 : f32
    %9 = vector.broadcast %cst_5 : f32 to vector<8x256xf32>
    %10 = arith.addf %8, %9 : vector<8x256xf32>
    %c0_6 = arith.constant 0 : index
    %c0_7 = arith.constant 0 : index
    %11 = vector.load %arg3[%c0_6, %c0_7] : memref<8x256xf32, #tpu.memory_space<vmem>>, vector<8x256xf32>
    tpu.vector_store %arg3[%c0_6, %c0_7], %10 {strides = array<i32>} : memref<8x256xf32, #tpu.memory_space<vmem>>, vector<8x256xf32>,
    return
  }
  func.func @transform_0(%arg0: i32) -> (i32, i32) {
    %c0_i32 = arith.constant 0 : i32
    %c0_i32_0 = arith.constant 0 : i32
    return %arg0, %c0_i32 : i32, i32
  }
  func.func @transform_1(%arg0: i32) -> (i32, i32) {
    %c0_i32 = arith.constant 0 : i32
    %c0_i32_0 = arith.constant 0 : i32
    return %arg0, %c0_i32 : i32, i32
  }
  func.func @transform_2(%arg0: i32) -> (i32, i32) {
    %c0_i32 = arith.constant 0 : i32
    %c0_i32_0 = arith.constant 0 : i32
    return %arg0, %c0_i32 : i32, i32
  }
}

</mosaic_0001>

<llo_original>
// kernel: jxy_forward.1
$region0: #{jxy_forward.1}
  #allocation0 [shape = 'u32[]', space=smem, size = 0x4, offset = 0x4, fixed_abs, tag = 'smem constant byte address 0x4 - core index']
  #allocation1 [shape = 'u32[144,128]{1,0:T(1,128)}', space=vmem, size = 0x12000, scoped, tag = 'internal scratch']
  %s0 = inlined_call_operand.vmem [shape: f32[8,256], index: 0, kind: input, shape index: {}]
  %s1 = inlined_call_operand.vmem [shape: f32[8,256], index: 1, kind: output, shape index: {0}]
  %s2 = inlined_call_operand.vmem [shape: f32[8,256], index: 2, kind: output, shape index: {1}]
  %3 = xla_tuple %s1, %s2
  %s4 = sld [smem:[#allocation0]]
  $region22: #{jxy_forward.1} parent=0
    _
  %s6 = ssub.s32 1, %s4
  %s7 = scalar_select 0, %s6, %s4
  // Predicated region
  $region2: #{jxy_forward.1} parent=0 // pred_check
    _
  $region3: #{jxy_forward.1} parent=0 // pred_check_branch
    %9 = sbr.rel (0) target = $region5
  $region4: #{jxy_forward.1} parent=0 // pred_region
    _
  $region5: #{jxy_forward.1} parent=0 // pred_fallthru
    _
  %v10 = vld [vmem:[%s0] sm:$0xff]
  %v11 = vld [vmem:[%s0 + $0x8] sm:$0xff]
  %v12 = vmax.f32 %v10, 0.0
  %v13 = vmax.f32 %v11, 0.0
  %14 = vst [vmem:[%s1] sm:$0xff] %v12
  %15 = vst [vmem:[%s1 + $0x8] sm:$0xff] %v13
  %v16 = vmul.f32 %v10, 0.5
  %v17 = vmul.f32 %v11, 0.5
  %v18 = vtanh.pop %v16
  %v19 = vtanh.pop %v17
  %v20 = vmul.f32 %v18, 0.5
  %v21 = vmul.f32 %v19, 0.5
  %v22 = vadd.f32 %v20, 0.5
  %v23 = vadd.f32 %v21, 0.5
  %24 = vst [vmem:[%s2] sm:$0xff] %v22
  %25 = vst [vmem:[%s2 + $0x8] sm:$0xff] %v23
  // Predicated region
  $region6: #{jxy_forward.1} parent=0 // pred_check
    _
  $region7: #{jxy_forward.1} parent=0 // pred_check_branch
    %27 = sbr.rel (0) target = $region9
  $region8: #{jxy_forward.1} parent=0 // pred_region
    _
  $region9: #{jxy_forward.1} parent=0 // pred_fallthru
    _
  // Predicated region
  $region10: #{jxy_forward.1} parent=0 // pred_check
    _
  $region11: #{jxy_forward.1} parent=0 // pred_check_branch
    %29 = sbr.rel (0) target = $region13
  $region12: #{jxy_forward.1} parent=0 // pred_region
    _
  $region13: #{jxy_forward.1} parent=0 // pred_fallthru
    _
  // Predicated region
  $region14: #{jxy_forward.1} parent=0 // pred_check
    _
  $region15: #{jxy_forward.1} parent=0 // pred_check_branch
    %31 = sbr.rel (0) target = $region17
  $region16: #{jxy_forward.1} parent=0 // pred_region
    _
  $region17: #{jxy_forward.1} parent=0 // pred_fallthru
    _
  // Predicated region
  $region18: #{jxy_forward.1} parent=0 // pred_check
    _
  $region19: #{jxy_forward.1} parent=0 // pred_check_branch
    %33 = sbr.rel (0) target = $region21
  $region20: #{jxy_forward.1} parent=0 // pred_region
    _
  $region21: #{jxy_forward.1} parent=0 // pred_fallthru
    _

</llo_original>
